<compile_context>
chip_gen: v7x
topology: tpu7x:2x2x1
jax: 0.10.0
libtpu: 0.0.40
codegen_flags: <defaults>
</compile_context>

<pallas_src>
import functools

import jax
import jax.numpy as jnp
from jax.experimental import pallas as pl
from jax.experimental.pallas import tpu as pltpu


def _sigmoid(z):
    # EUP exp + approximate EUP reciprocal (stays off the VALU critical path;
    # ~1e-3-level error is fine for a gating activation).
    return pl.reciprocal(1.0 + jnp.exp(-z), approx=True)


# ---------------------------------------------------------------------------
# Small-C path: channels fit below one sublane tile -> pure-VPU contraction.
# ---------------------------------------------------------------------------
def _attention_kernel_small_c(x_ref, w_ref, b_ref, o_ref):
    # x_ref / o_ref: (nb, C, rt, 128) block; each channel is a dense
    #                (sublane, lane) slab.
    # w_ref: (C*C,) f32 in SMEM, row-major (C_out, C_in), BN scale pre-folded.
    # b_ref: (C,)   f32 in SMEM, folded BN bias.
    C = o_ref.shape[1]
    x = x_ref[...]
    xf = x.astype(jnp.float32)
    for o in range(C):                        # unrolled: C*C scalar-bcast FMAs (VPU)
        z = w_ref[o * C] * xf[:, 0]
        for c in range(1, C):
            z = z + w_ref[o * C + c] * xf[:, c]
        a = _sigmoid(z + b_ref[o])
        # gate in the input dtype (bf16 on v6e/v7x halves VALU/store traffic)
        o_ref[:, o, :, :] = (a.astype(x.dtype) * x[:, o]).astype(o_ref.dtype)


def _attention_small_c(x4, w_flat_f32, b_f32, target_bytes):
    N, C, R, L = x4.shape                     # L == 128
    itemsize = jnp.dtype(x4.dtype).itemsize
    sub = max(1, 32 // itemsize)              # sublane tile: 8 f32 / 16 bf16

    # Rows (sublanes) per block: multiple of 8 (or the full extent when small),
    # sized toward ~target_bytes of physical VMEM; ragged tail handled by Pallas.
    if R <= sub:
        rt = R
    else:
        want = max(sub, target_bytes // (C * L * itemsize))
        rt = max(sub, min((want // sub) * sub, (R // sub) * sub))
    rt_phys = ((rt + sub - 1) // sub) * sub   # sublane-padded rows
    per_image = C * rt_phys * L * itemsize

    # Batch sub-block so each step moves ~target_bytes; nb divides N exactly.
    nb = int(max(1, min(N, target_bytes // max(per_image, 1))))
    while N % nb:
        nb -= 1
    r_tiles = pl.cdiv(R, rt)
    if (N // nb) * r_tiles < 2 and nb > 1:    # keep >=2 parallel steps (v7x: 2 TCs)
        nb = max(1, nb // 2)
        while N % nb:
            nb -= 1

    blk_phys = nb * per_image                 # physical bytes of one x block
    vmem_limit = int(min(max(4 * blk_phys + (8 << 20), 16 << 20), 48 << 20))

    return pl.pallas_call(
        _attention_kernel_small_c,
        out_shape=jax.ShapeDtypeStruct(x4.shape, x4.dtype),
        grid_spec=pltpu.PrefetchScalarGridSpec(
            num_scalar_prefetch=0,
            grid=(N // nb, r_tiles),
            in_specs=[
                pl.BlockSpec((nb, C, rt, L), lambda b, r: (b, 0, r, 0)),
                # weights/bias as flat f32 scalars in SMEM (1-D avoids the
                # (8,128)-word 2-D SMEM padding)
                pl.BlockSpec(memory_space=pltpu.MemorySpace.SMEM),
                pl.BlockSpec(memory_space=pltpu.MemorySpace.SMEM),
            ],
            out_specs=pl.BlockSpec((nb, C, rt, L), lambda b, r: (b, 0, r, 0)),
        ),
        compiler_params=pltpu.CompilerParams(
            dimension_semantics=("parallel", "parallel"),
            vmem_limit_bytes=vmem_limit,
        ),
    )(x4, w_flat_f32, b_f32)


# ---------------------------------------------------------------------------
# General path: lane-dense (C, spatial) blocks + MXU contraction.
# ---------------------------------------------------------------------------
def _attention_kernel_matmul(x_ref, w_ref, b_ref, o_ref):
    # x_ref/o_ref: (C, ts); w_ref: (C, C) f32 (BN scale folded); b_ref: (C, 1) f32
    xf = x_ref[...].astype(jnp.float32)
    z = jnp.dot(w_ref[...], xf, preferred_element_type=jnp.float32) + b_ref[...]
    o_ref[...] = (_sigmoid(z) * xf).astype(o_ref.dtype)


def _attention_matmul(x_ncs, w_f32, b_col_f32, target_bytes):
    N, C, S = x_ncs.shape
    itemsize = jnp.dtype(x_ncs.dtype).itemsize
    sub = max(1, 32 // itemsize)
    c_phys = ((C + sub - 1) // sub) * sub     # sublane-padded channel extent

    if S <= 128:
        ts = S                                # whole (small) spatial extent
    else:
        want = max(128, (target_bytes // (c_phys * itemsize)) // 128 * 128)
        ts = min(want, (S // 128) * 128)      # multiple of 128; ragged tail OK

    blk_phys = c_phys * ts * itemsize
    w_phys = (((C + 7) // 8) * 8) * (((C + 127) // 128) * 128) * 4
    vmem_limit = int(min(max(4 * blk_phys + 2 * w_phys + (8 << 20), 16 << 20),
                         48 << 20))

    return pl.pallas_call(
        _attention_kernel_matmul,
        out_shape=jax.ShapeDtypeStruct((N, C, S), x_ncs.dtype),
        grid_spec=pltpu.PrefetchScalarGridSpec(
            num_scalar_prefetch=0,
            grid=(N, pl.cdiv(S, ts)),
            in_specs=[
                pl.BlockSpec((None, C, ts), lambda n, s: (n, 0, s)),
                pl.BlockSpec((C, C), lambda n, s: (0, 0)),
                pl.BlockSpec((C, 1), lambda n, s: (0, 0)),
            ],
            out_specs=pl.BlockSpec((None, C, ts), lambda n, s: (n, 0, s)),
        ),
        compiler_params=pltpu.CompilerParams(
            dimension_semantics=("parallel", "parallel"),
            vmem_limit_bytes=vmem_limit,
        ),
    )(x_ncs, w_f32, b_col_f32)


# ---------------------------------------------------------------------------
# Wrapper
# ---------------------------------------------------------------------------
@functools.partial(jax.jit, static_argnames=("block_target_bytes",))
def attention_module(x_nchw, w_dense, scale, bias, *, block_target_bytes=4 << 20):
    """y = sigmoid(BN(conv1x1(x))) * x with inference-mode BN folded.

    x_nchw: (N, C, H, W); w_dense: dense (C_out, C_in) 1x1-conv weight;
    scale/bias: folded BatchNorm affine.  Returns (N, C, H, W).
    """
    N, C, H, W = x_nchw.shape
    S = H * W
    itemsize = jnp.dtype(x_nchw.dtype).itemsize
    sub = max(1, 32 // itemsize)

    # Fold BN scale into the conv weight in f32 (no low-precision rounding of
    # scale*W before the contraction); bias stays f32 for the epilogue.
    w_f32 = w_dense.astype(jnp.float32) * scale.astype(jnp.float32)[:, None]
    b_f32 = bias.astype(jnp.float32)

    if C < sub and S % 128 == 0:
        # Dense per-channel (sublane, lane) layout + VPU contraction.
        out = _attention_small_c(x_nchw.reshape(N, C, S // 128, 128),
                                 w_f32.reshape(-1), b_f32, block_target_bytes)
    else:
        # Lane-dense (C, spatial) layout + MXU contraction.
        out = _attention_matmul(x_nchw.reshape(N, C, S), w_f32,
                                b_f32.reshape(C, 1), block_target_bytes)
    return out.reshape(N, C, H, W)


def make_params(in_channels, groups=1, seed=0, dtype=jnp.float32):
    """Deterministic parameters matching the PyTorch module's shapes.
    The grouped conv weight is expanded to its dense (C_out, C_in) block-
    diagonal equivalent; inference-mode BN is folded to per-channel affine."""
    key = jax.random.PRNGKey(seed)
    k_w, k_g, k_b, k_m, k_v = jax.random.split(key, 5)

    C = in_channels
    cpg = C // groups                        # PyTorch weight: (C, C//groups, 1, 1)
    w_conv = jax.random.normal(k_w, (C, cpg), dtype=dtype) * 0.1

    w_dense = jnp.zeros((C, C), dtype=dtype)
    for g in range(groups):
        o = g * cpg
        w_dense = w_dense.at[o:o + cpg, o:o + cpg].set(w_conv[o:o + cpg, :])

    gamma = 1.0 + 0.1 * jax.random.normal(k_g, (C,), dtype=dtype)
    beta = 0.1 * jax.random.normal(k_b, (C,), dtype=dtype)
    running_mean = 0.1 * jax.random.normal(k_m, (C,), dtype=dtype)
    running_var = 1.0 + 0.1 * jax.random.uniform(k_v, (C,), dtype=dtype)
    eps = 1e-5

    scale = gamma / jnp.sqrt(running_var + eps)
    bias = beta - running_mean * scale
    return w_dense, scale, bias


def _reference(x_nchw, w_dense, scale, bias):
    # pure-JAX reference of the same math (conv -> BN -> sigmoid -> gate)
    N, C, H, W = x_nchw.shape
    x = x_nchw.astype(jnp.float32).reshape(N, C, H * W)
    z = jnp.einsum("oc,ncs->nos", w_dense.astype(jnp.float32), x)
    a = jax.nn.sigmoid(z * scale[None, :, None] + bias[None, :, None])
    return (a * x).reshape(N, C, H, W).astype(x_nchw.dtype)


if __name__ == "__main__":
    N, C, H, W = 2, 4, 16, 16
    groups = 1

    key = jax.random.PRNGKey(0)
    x = jax.random.normal(key, (N, C, H, W), dtype=jnp.float32)
    w_dense, scale, bias = make_params(C, groups=groups, seed=0)

    out = jax.block_until_ready(attention_module(x, w_dense, scale, bias))
    ref = _reference(x, w_dense, scale, bias)
    assert out.shape == (N, C, H, W)
    # tolerance relaxed because the sigmoid uses the approximate EUP reciprocal
    err = float(jnp.max(jnp.abs(out.astype(jnp.float32) - ref.astype(jnp.float32))))
    assert err < 2e-2, f"small-C path max |err| = {err}"

    # Also exercise the general (MXU) path: H*W not a multiple of 128.
    x2 = jax.random.normal(jax.random.PRNGKey(1), (2, 4, 10, 10), dtype=jnp.float32)
    out2 = jax.block_until_ready(attention_module(x2, w_dense, scale, bias))
    ref2 = _reference(x2, w_dense, scale, bias)
    err2 = float(jnp.max(jnp.abs(out2.astype(jnp.float32) - ref2.astype(jnp.float32))))
    assert out2.shape == x2.shape
    assert err2 < 2e-2, f"matmul path max |err| = {err2}"

    print("KERNEL_OK")
</pallas_src>

<mosaic_0001>
module attributes {stable_mosaic.version = 11 : i64} {
  func.func @_attention_kernel_small_c(%arg0: i32, %arg1: i32, %arg2: memref<1x4x2x128xf32, #tpu.memory_space<vmem>>, %arg3: memref<16xf32, #tpu.memory_space<smem>>, %arg4: memref<4xf32, #tpu.memory_space<smem>>, %arg5: memref<1x4x2x128xf32, #tpu.memory_space<vmem>>) attributes {dimension_semantics = [#tpu.dimension_semantics<parallel>, #tpu.dimension_semantics<parallel>], iteration_bounds = array<i64: 2, 1>, scalar_prefetch = 0 : i64, scratch_operands = 0 : i64, tpu.core_type = #tpu.core_type<tc>, window_params = [{transform_indices = @transform_0, window_bounds = array<i64: 1, 4, 2, 128>}, {transform_indices = @transform_1, window_bounds = array<i64: 16>}, {transform_indices = @transform_2, window_bounds = array<i64: 4>}, {transform_indices = @transform_3, window_bounds = array<i64: 1, 4, 2, 128>}]} {
    %c0 = arith.constant 0 : index
    %c0_0 = arith.constant 0 : index
    %c0_1 = arith.constant 0 : index
    %c0_2 = arith.constant 0 : index
    %0 = vector.load %arg2[%c0, %c0_0, %c0_1, %c0_2] : memref<1x4x2x128xf32, #tpu.memory_space<vmem>>, vector<1x4x2x128xf32>
    %c0_3 = arith.constant 0 : index
    %1 = memref.load %arg3[%c0_3] : memref<16xf32, #tpu.memory_space<smem>>
    %2 = vector.extract_strided_slice %0 {offsets = [0, 0, 0, 0], sizes = [1, 1, 2, 128], strides = [1, 1, 1, 1]} : vector<1x4x2x128xf32> to vector<1x1x2x128xf32>
    %3 = vector.shape_cast %2 : vector<1x1x2x128xf32> to vector<1x2x128xf32>
    %4 = vector.broadcast %1 : f32 to vector<1x2x128xf32>
    %5 = arith.mulf %4, %3 : vector<1x2x128xf32>
    %c1 = arith.constant 1 : index
    %6 = memref.load %arg3[%c1] : memref<16xf32, #tpu.memory_space<smem>>
    %7 = vector.extract_strided_slice %0 {offsets = [0, 1, 0, 0], sizes = [1, 1, 2, 128], strides = [1, 1, 1, 1]} : vector<1x4x2x128xf32> to vector<1x1x2x128xf32>
    %8 = vector.shape_cast %7 : vector<1x1x2x128xf32> to vector<1x2x128xf32>
    %9 = vector.broadcast %6 : f32 to vector<1x2x128xf32>
    %10 = arith.mulf %9, %8 : vector<1x2x128xf32>
    %11 = arith.addf %5, %10 : vector<1x2x128xf32>
    %c2 = arith.constant 2 : index
    %12 = memref.load %arg3[%c2] : memref<16xf32, #tpu.memory_space<smem>>
    %13 = vector.extract_strided_slice %0 {offsets = [0, 2, 0, 0], sizes = [1, 1, 2, 128], strides = [1, 1, 1, 1]} : vector<1x4x2x128xf32> to vector<1x1x2x128xf32>
    %14 = vector.shape_cast %13 : vector<1x1x2x128xf32> to vector<1x2x128xf32>
    %15 = vector.broadcast %12 : f32 to vector<1x2x128xf32>
    %16 = arith.mulf %15, %14 : vector<1x2x128xf32>
    %17 = arith.addf %11, %16 : vector<1x2x128xf32>
    %c3 = arith.constant 3 : index
    %18 = memref.load %arg3[%c3] : memref<16xf32, #tpu.memory_space<smem>>
    %19 = vector.extract_strided_slice %0 {offsets = [0, 3, 0, 0], sizes = [1, 1, 2, 128], strides = [1, 1, 1, 1]} : vector<1x4x2x128xf32> to vector<1x1x2x128xf32>
    %20 = vector.shape_cast %19 : vector<1x1x2x128xf32> to vector<1x2x128xf32>
    %21 = vector.broadcast %18 : f32 to vector<1x2x128xf32>
    %22 = arith.mulf %21, %20 : vector<1x2x128xf32>
    %23 = arith.addf %17, %22 : vector<1x2x128xf32>
    %c0_4 = arith.constant 0 : index
    %24 = memref.load %arg4[%c0_4] : memref<4xf32, #tpu.memory_space<smem>>
    %25 = vector.broadcast %24 : f32 to vector<1x2x128xf32>
    %26 = arith.addf %23, %25 : vector<1x2x128xf32>
    %cst = arith.constant 0.000000e+00 : f32
    %27 = vector.broadcast %cst : f32 to vector<1x2x128xf32>
    %28 = arith.subf %27, %26 : vector<1x2x128xf32>
    %29 = math.exp %28 : vector<1x2x128xf32>
    %cst_5 = arith.constant 1.000000e+00 : f32
    %30 = vector.broadcast %cst_5 : f32 to vector<1x2x128xf32>
    %31 = arith.addf %30, %29 : vector<1x2x128xf32>
    %32 = tpu.reciprocal %31 {approx = true} : vector<1x2x128xf32> -> vector<1x2x128xf32>
    %33 = vector.extract_strided_slice %0 {offsets = [0, 0, 0, 0], sizes = [1, 1, 2, 128], strides = [1, 1, 1, 1]} : vector<1x4x2x128xf32> to vector<1x1x2x128xf32>
    %34 = vector.shape_cast %33 : vector<1x1x2x128xf32> to vector<1x2x128xf32>
    %35 = arith.mulf %32, %34 : vector<1x2x128xf32>
    %c0_6 = arith.constant 0 : index
    %c0_7 = arith.constant 0 : index
    %c0_8 = arith.constant 0 : index
    %c0_9 = arith.constant 0 : index
    %36 = vector.load %arg5[%c0_6, %c0_7, %c0_8, %c0_9] : memref<1x4x2x128xf32, #tpu.memory_space<vmem>>, vector<1x1x2x128xf32>
    %37 = vector.shape_cast %36 : vector<1x1x2x128xf32> to vector<1x2x128xf32>
    %38 = vector.shape_cast %35 : vector<1x2x128xf32> to vector<1x1x2x128xf32>
    tpu.vector_store %arg5[%c0_6, %c0_7, %c0_8, %c0_9], %38 {strides = array<i32>} : memref<1x4x2x128xf32, #tpu.memory_space<vmem>>, vector<1x1x2x128xf32>,
    %c4 = arith.constant 4 : index
    %39 = memref.load %arg3[%c4] : memref<16xf32, #tpu.memory_space<smem>>
    %40 = vector.extract_strided_slice %0 {offsets = [0, 0, 0, 0], sizes = [1, 1, 2, 128], strides = [1, 1, 1, 1]} : vector<1x4x2x128xf32> to vector<1x1x2x128xf32>
    %41 = vector.shape_cast %40 : vector<1x1x2x128xf32> to vector<1x2x128xf32>
    %42 = vector.broadcast %39 : f32 to vector<1x2x128xf32>
    %43 = arith.mulf %42, %41 : vector<1x2x128xf32>
    %c5 = arith.constant 5 : index
    %44 = memref.load %arg3[%c5] : memref<16xf32, #tpu.memory_space<smem>>
    %45 = vector.extract_strided_slice %0 {offsets = [0, 1, 0, 0], sizes = [1, 1, 2, 128], strides = [1, 1, 1, 1]} : vector<1x4x2x128xf32> to vector<1x1x2x128xf32>
    %46 = vector.shape_cast %45 : vector<1x1x2x128xf32> to vector<1x2x128xf32>
    %47 = vector.broadcast %44 : f32 to vector<1x2x128xf32>
    %48 = arith.mulf %47, %46 : vector<1x2x128xf32>
    %49 = arith.addf %43, %48 : vector<1x2x128xf32>
    %c6 = arith.constant 6 : index
    %50 = memref.load %arg3[%c6] : memref<16xf32, #tpu.memory_space<smem>>
    %51 = vector.extract_strided_slice %0 {offsets = [0, 2, 0, 0], sizes = [1, 1, 2, 128], strides = [1, 1, 1, 1]} : vector<1x4x2x128xf32> to vector<1x1x2x128xf32>
    %52 = vector.shape_cast %51 : vector<1x1x2x128xf32> to vector<1x2x128xf32>
    %53 = vector.broadcast %50 : f32 to vector<1x2x128xf32>
    %54 = arith.mulf %53, %52 : vector<1x2x128xf32>
    %55 = arith.addf %49, %54 : vector<1x2x128xf32>
    %c7 = arith.constant 7 : index
    %56 = memref.load %arg3[%c7] : memref<16xf32, #tpu.memory_space<smem>>
    %57 = vector.extract_strided_slice %0 {offsets = [0, 3, 0, 0], sizes = [1, 1, 2, 128], strides = [1, 1, 1, 1]} : vector<1x4x2x128xf32> to vector<1x1x2x128xf32>
    %58 = vector.shape_cast %57 : vector<1x1x2x128xf32> to vector<1x2x128xf32>
    %59 = vector.broadcast %56 : f32 to vector<1x2x128xf32>
    %60 = arith.mulf %59, %58 : vector<1x2x128xf32>
    %61 = arith.addf %55, %60 : vector<1x2x128xf32>
    %c1_10 = arith.constant 1 : index
    %62 = memref.load %arg4[%c1_10] : memref<4xf32, #tpu.memory_space<smem>>
    %63 = vector.broadcast %62 : f32 to vector<1x2x128xf32>
    %64 = arith.addf %61, %63 : vector<1x2x128xf32>
    %cst_11 = arith.constant 0.000000e+00 : f32
    %65 = vector.broadcast %cst_11 : f32 to vector<1x2x128xf32>
    %66 = arith.subf %65, %64 : vector<1x2x128xf32>
    %67 = math.exp %66 : vector<1x2x128xf32>
    %cst_12 = arith.constant 1.000000e+00 : f32
    %68 = vector.broadcast %cst_12 : f32 to vector<1x2x128xf32>
    %69 = arith.addf %68, %67 : vector<1x2x128xf32>
    %70 = tpu.reciprocal %69 {approx = true} : vector<1x2x128xf32> -> vector<1x2x128xf32>
    %71 = vector.extract_strided_slice %0 {offsets = [0, 1, 0, 0], sizes = [1, 1, 2, 128], strides = [1, 1, 1, 1]} : vector<1x4x2x128xf32> to vector<1x1x2x128xf32>
    %72 = vector.shape_cast %71 : vector<1x1x2x128xf32> to vector<1x2x128xf32>
    %73 = arith.mulf %70, %72 : vector<1x2x128xf32>
    %c0_13 = arith.constant 0 : index
    %c1_14 = arith.constant 1 : index
    %c0_15 = arith.constant 0 : index
    %c0_16 = arith.constant 0 : index
    %74 = vector.load %arg5[%c0_13, %c1_14, %c0_15, %c0_16] : memref<1x4x2x128xf32, #tpu.memory_space<vmem>>, vector<1x1x2x128xf32>
    %75 = vector.shape_cast %74 : vector<1x1x2x128xf32> to vector<1x2x128xf32>
    %76 = vector.shape_cast %73 : vector<1x2x128xf32> to vector<1x1x2x128xf32>
    tpu.vector_store %arg5[%c0_13, %c1_14, %c0_15, %c0_16], %76 {strides = array<i32>} : memref<1x4x2x128xf32, #tpu.memory_space<vmem>>, vector<1x1x2x128xf32>,
    %c8 = arith.constant 8 : index
    %77 = memref.load %arg3[%c8] : memref<16xf32, #tpu.memory_space<smem>>
    %78 = vector.extract_strided_slice %0 {offsets = [0, 0, 0, 0], sizes = [1, 1, 2, 128], strides = [1, 1, 1, 1]} : vector<1x4x2x128xf32> to vector<1x1x2x128xf32>
    %79 = vector.shape_cast %78 : vector<1x1x2x128xf32> to vector<1x2x128xf32>
    %80 = vector.broadcast %77 : f32 to vector<1x2x128xf32>
    %81 = arith.mulf %80, %79 : vector<1x2x128xf32>
    %c9 = arith.constant 9 : index
    %82 = memref.load %arg3[%c9] : memref<16xf32, #tpu.memory_space<smem>>
    %83 = vector.extract_strided_slice %0 {offsets = [0, 1, 0, 0], sizes = [1, 1, 2, 128], strides = [1, 1, 1, 1]} : vector<1x4x2x128xf32> to vector<1x1x2x128xf32>
    %84 = vector.shape_cast %83 : vector<1x1x2x128xf32> to vector<1x2x128xf32>
    %85 = vector.broadcast %82 : f32 to vector<1x2x128xf32>
    %86 = arith.mulf %85, %84 : vector<1x2x128xf32>
    %87 = arith.addf %81, %86 : vector<1x2x128xf32>
    %c10 = arith.constant 10 : index
    %88 = memref.load %arg3[%c10] : memref<16xf32, #tpu.memory_space<smem>>
    %89 = vector.extract_strided_slice %0 {offsets = [0, 2, 0, 0], sizes = [1, 1, 2, 128], strides = [1, 1, 1, 1]} : vector<1x4x2x128xf32> to vector<1x1x2x128xf32>
    %90 = vector.shape_cast %89 : vector<1x1x2x128xf32> to vector<1x2x128xf32>
    %91 = vector.broadcast %88 : f32 to vector<1x2x128xf32>
    %92 = arith.mulf %91, %90 : vector<1x2x128xf32>
    %93 = arith.addf %87, %92 : vector<1x2x128xf32>
    %c11 = arith.constant 11 : index
    %94 = memref.load %arg3[%c11] : memref<16xf32, #tpu.memory_space<smem>>
    %95 = vector.extract_strided_slice %0 {offsets = [0, 3, 0, 0], sizes = [1, 1, 2, 128], strides = [1, 1, 1, 1]} : vector<1x4x2x128xf32> to vector<1x1x2x128xf32>
    %96 = vector.shape_cast %95 : vector<1x1x2x128xf32> to vector<1x2x128xf32>
    %97 = vector.broadcast %94 : f32 to vector<1x2x128xf32>
    %98 = arith.mulf %97, %96 : vector<1x2x128xf32>
    %99 = arith.addf %93, %98 : vector<1x2x128xf32>
    %c2_17 = arith.constant 2 : index
    %100 = memref.load %arg4[%c2_17] : memref<4xf32, #tpu.memory_space<smem>>
    %101 = vector.broadcast %100 : f32 to vector<1x2x128xf32>
    %102 = arith.addf %99, %101 : vector<1x2x128xf32>
    %cst_18 = arith.constant 0.000000e+00 : f32
    %103 = vector.broadcast %cst_18 : f32 to vector<1x2x128xf32>
    %104 = arith.subf %103, %102 : vector<1x2x128xf32>
    %105 = math.exp %104 : vector<1x2x128xf32>
    %cst_19 = arith.constant 1.000000e+00 : f32
    %106 = vector.broadcast %cst_19 : f32 to vector<1x2x128xf32>
    %107 = arith.addf %106, %105 : vector<1x2x128xf32>
    %108 = tpu.reciprocal %107 {approx = true} : vector<1x2x128xf32> -> vector<1x2x128xf32>
    %109 = vector.extract_strided_slice %0 {offsets = [0, 2, 0, 0], sizes = [1, 1, 2, 128], strides = [1, 1, 1, 1]} : vector<1x4x2x128xf32> to vector<1x1x2x128xf32>
    %110 = vector.shape_cast %109 : vector<1x1x2x128xf32> to vector<1x2x128xf32>
    %111 = arith.mulf %108, %110 : vector<1x2x128xf32>
    %c0_20 = arith.constant 0 : index
    %c2_21 = arith.constant 2 : index
    %c0_22 = arith.constant 0 : index
    %c0_23 = arith.constant 0 : index
    %112 = vector.load %arg5[%c0_20, %c2_21, %c0_22, %c0_23] : memref<1x4x2x128xf32, #tpu.memory_space<vmem>>, vector<1x1x2x128xf32>
    %113 = vector.shape_cast %112 : vector<1x1x2x128xf32> to vector<1x2x128xf32>
    %114 = vector.shape_cast %111 : vector<1x2x128xf32> to vector<1x1x2x128xf32>
    tpu.vector_store %arg5[%c0_20, %c2_21, %c0_22, %c0_23], %114 {strides = array<i32>} : memref<1x4x2x128xf32, #tpu.memory_space<vmem>>, vector<1x1x2x128xf32>,
    %c12 = arith.constant 12 : index
    %115 = memref.load %arg3[%c12] : memref<16xf32, #tpu.memory_space<smem>>
    %116 = vector.extract_strided_slice %0 {offsets = [0, 0, 0, 0], sizes = [1, 1, 2, 128], strides = [1, 1, 1, 1]} : vector<1x4x2x128xf32> to vector<1x1x2x128xf32>
    %117 = vector.shape_cast %116 : vector<1x1x2x128xf32> to vector<1x2x128xf32>
    %118 = vector.broadcast %115 : f32 to vector<1x2x128xf32>
    %119 = arith.mulf %118, %117 : vector<1x2x128xf32>
    %c13 = arith.constant 13 : index
    %120 = memref.load %arg3[%c13] : memref<16xf32, #tpu.memory_space<smem>>
    %121 = vector.extract_strided_slice %0 {offsets = [0, 1, 0, 0], sizes = [1, 1, 2, 128], strides = [1, 1, 1, 1]} : vector<1x4x2x128xf32> to vector<1x1x2x128xf32>
    %122 = vector.shape_cast %121 : vector<1x1x2x128xf32> to vector<1x2x128xf32>
    %123 = vector.broadcast %120 : f32 to vector<1x2x128xf32>
    %124 = arith.mulf %123, %122 : vector<1x2x128xf32>
    %125 = arith.addf %119, %124 : vector<1x2x128xf32>
    %c14 = arith.constant 14 : index
    %126 = memref.load %arg3[%c14] : memref<16xf32, #tpu.memory_space<smem>>
    %127 = vector.extract_strided_slice %0 {offsets = [0, 2, 0, 0], sizes = [1, 1, 2, 128], strides = [1, 1, 1, 1]} : vector<1x4x2x128xf32> to vector<1x1x2x128xf32>
    %128 = vector.shape_cast %127 : vector<1x1x2x128xf32> to vector<1x2x128xf32>
    %129 = vector.broadcast %126 : f32 to vector<1x2x128xf32>
    %130 = arith.mulf %129, %128 : vector<1x2x128xf32>
    %131 = arith.addf %125, %130 : vector<1x2x128xf32>
    %c15 = arith.constant 15 : index
    %132 = memref.load %arg3[%c15] : memref<16xf32, #tpu.memory_space<smem>>
    %133 = vector.extract_strided_slice %0 {offsets = [0, 3, 0, 0], sizes = [1, 1, 2, 128], strides = [1, 1, 1, 1]} : vector<1x4x2x128xf32> to vector<1x1x2x128xf32>
    %134 = vector.shape_cast %133 : vector<1x1x2x128xf32> to vector<1x2x128xf32>
    %135 = vector.broadcast %132 : f32 to vector<1x2x128xf32>
    %136 = arith.mulf %135, %134 : vector<1x2x128xf32>
    %137 = arith.addf %131, %136 : vector<1x2x128xf32>
    %c3_24 = arith.constant 3 : index
    %138 = memref.load %arg4[%c3_24] : memref<4xf32, #tpu.memory_space<smem>>
    %139 = vector.broadcast %138 : f32 to vector<1x2x128xf32>
    %140 = arith.addf %137, %139 : vector<1x2x128xf32>
    %cst_25 = arith.constant 0.000000e+00 : f32
    %141 = vector.broadcast %cst_25 : f32 to vector<1x2x128xf32>
    %142 = arith.subf %141, %140 : vector<1x2x128xf32>
    %143 = math.exp %142 : vector<1x2x128xf32>
    %cst_26 = arith.constant 1.000000e+00 : f32
    %144 = vector.broadcast %cst_26 : f32 to vector<1x2x128xf32>
    %145 = arith.addf %144, %143 : vector<1x2x128xf32>
    %146 = tpu.reciprocal %145 {approx = true} : vector<1x2x128xf32> -> vector<1x2x128xf32>
    %147 = vector.extract_strided_slice %0 {offsets = [0, 3, 0, 0], sizes = [1, 1, 2, 128], strides = [1, 1, 1, 1]} : vector<1x4x2x128xf32> to vector<1x1x2x128xf32>
    %148 = vector.shape_cast %147 : vector<1x1x2x128xf32> to vector<1x2x128xf32>
    %149 = arith.mulf %146, %148 : vector<1x2x128xf32>
    %c0_27 = arith.constant 0 : index
    %c3_28 = arith.constant 3 : index
    %c0_29 = arith.constant 0 : index
    %c0_30 = arith.constant 0 : index
    %150 = vector.load %arg5[%c0_27, %c3_28, %c0_29, %c0_30] : memref<1x4x2x128xf32, #tpu.memory_space<vmem>>, vector<1x1x2x128xf32>
    %151 = vector.shape_cast %150 : vector<1x1x2x128xf32> to vector<1x2x128xf32>
    %152 = vector.shape_cast %149 : vector<1x2x128xf32> to vector<1x1x2x128xf32>
    tpu.vector_store %arg5[%c0_27, %c3_28, %c0_29, %c0_30], %152 {strides = array<i32>} : memref<1x4x2x128xf32, #tpu.memory_space<vmem>>, vector<1x1x2x128xf32>,
    return
  }
  func.func @transform_0(%arg0: i32, %arg1: i32) -> (i32, i32, i32, i32) {
    %c0_i32 = arith.constant 0 : i32
    %c0_i32_0 = arith.constant 0 : i32
    %c0_i32_1 = arith.constant 0 : i32
    return %arg0, %c0_i32, %arg1, %c0_i32_0 : i32, i32, i32, i32
  }
  func.func @transform_1(%arg0: i32, %arg1: i32) -> i32 {
    %c0_i32 = arith.constant 0 : i32
    %c0_i32_0 = arith.constant 0 : i32
    return %c0_i32 : i32
  }
  func.func @transform_2(%arg0: i32, %arg1: i32) -> i32 {
    %c0_i32 = arith.constant 0 : i32
    %c0_i32_0 = arith.constant 0 : i32
    return %c0_i32 : i32
  }
  func.func @transform_3(%arg0: i32, %arg1: i32) -> (i32, i32, i32, i32) {
    %c0_i32 = arith.constant 0 : i32
    %c0_i32_0 = arith.constant 0 : i32
    %c0_i32_1 = arith.constant 0 : i32
    return %arg0, %c0_i32, %arg1, %c0_i32_0 : i32, i32, i32, i32
  }
}

</mosaic_0001>

<llo_original>
// kernel: attention_module.1
$region0: #{attention_module.1}
  #allocation0 [shape = 'u32[]', space=smem, size = 0x4, offset = 0x4, fixed_abs, tag = 'smem constant byte address 0x4 - core index']
  #allocation1 [shape = 'u32[144,128]{1,0:T(1,128)}', space=vmem, size = 0x12000, scoped, tag = 'internal scratch']
  %s0 = inlined_call_operand.vmem [shape: f32[2,4,2,128], index: 0, kind: input, shape index: {}]
  %s1 = inlined_call_operand.vmem [shape: f32[16], index: 1, kind: input, shape index: {}]
  %s2 = inlined_call_operand.vmem [shape: f32[4], index: 2, kind: input, shape index: {}]
  %s3 = inlined_call_operand.vmem [shape: f32[2,4,2,128], index: 3, kind: output, shape index: {}]
  %s4 = sld [smem:[#allocation0]]
  $region53: #{attention_module.1} parent=0
    _
  %s6 = ssub.s32 1, %s4
  %s7 = scalar_select 0, %s6, %s4
  $region1: #{attention_module.1} parent=0
    #allocation2 [shape = 'u8[512]{0}', space=smem, size = 0x200, scoped, tag = 'input window, operand 1, single buffered']
    #allocation3 [shape = 's32[2]{0}', space=sflag, size = 0x8, scoped, tag = 'scoped memory for attention_module.1']
    #allocation4 [shape = 'u8[512]{0}', space=smem, size = 0x200, scoped, tag = 'input window, operand 2, single buffered']
    #allocation5 [shape = 's32[1]{0}', space=sflag, size = 0x4, scoped, tag = 'scoped memory for attention_module.1']
    %8 = vsyncpa [#allocation3], 0
    %9 = vsyncpa [#allocation5], 0
    loop: start=0, step=1, limit=4
    $region2: #{attention_module.1} parent=1 // loop_pre_header
      _
    $region3: #{attention_module.1} parent=1 // loop_header
      %s11 = sphi 0, %s15
      %p12 = scmp.ge.s32.totalorder %s11, 4
      %s18 = sphi 0, %s30
      %s19 = sphi 0, %s26
      %s20 = sphi 0, %s18
      %s21 = sphi 0, %s19
      %s22 = sphi 0, %s20
      %s23 = sphi 0, %s21
      %s35 = sphi 0, %s37
      %s38 = sphi 0, %s35
      %s39 = sphi 0, %s38
      %s55 = sphi 0, %s39
      %s59 = sphi 0, %s59
      %s61 = sphi 0, %s59
      %s62 = sphi 0, %s61
      %s76 = sphi 0, %s62
      %s80 = sphi 0, %s80
      %s82 = sphi 0, %s80
      %s83 = sphi 0, %s82
      %s97 = sphi 0, %s83
      %s105 = sphi 0, %s107
      %s108 = sphi 0, %s105
      %s109 = sphi 0, %s108
      %s125 = sphi 0, %s109
    $region4: #{attention_module.1} parent=1 // loop_header_branch
      %14 = sbr.rel (%p12) target = $region8
    $region5: #{attention_module.1} parent=1 // loop_body
      %s16 = ssub.s32 %s11, 1
      %s17 = ssub.s32 %s11, 2
      %s24 = sadd.s32 1, %s19
      %p25 = scmp.ge.s32.totalorder %s24, 1
      %s26 = scalar_select %p25, 0, %s24
      %s27 = sadd.s32 1, %s18
      %s28 = scalar_select %p25, %s27, %s18
      %p29 = scmp.ge.s32.totalorder %s28, 2
      %s30 = scalar_select %p29, 0, %s28
      %s31 = ssub.s32 %s18, %s30
      %s32 = ssub.s32 %s19, %s26
      %s33 = sor.u32 %s31, %s32
      %p34 = scmp.eq.s32.totalorder %s33, 0
      %s36 = sadd.s32 %s35, 1
      %s37 = scalar_select %p34, %s35, %s36
      %p40 = pneg %p34
      %p41 = scmp.eq.s32.totalorder %s11, 1
      %p42 = por %p40, %p41
      %p43 = scmp.ne.s32.totalorder %s35, %s38
      %p44 = scmp.eq.s32.totalorder %s11, 0
      %p45 = por %p43, %p44
      %p46 = scmp.ne.s32.totalorder %s35, %s38
      %p47 = scmp.eq.s32.totalorder %s16, 1
      %p48 = por %p46, %p47
      %p49 = scmp.ne.s32.totalorder %s38, %s39
      %p50 = scmp.eq.s32.totalorder %s16, 0
      %p51 = por %p49, %p50
      %p52 = scmp.ne.s32.totalorder %s38, %s39
      %p53 = scmp.eq.s32.totalorder %s17, 1
      %p54 = por %p52, %p53
      %p56 = scmp.ne.s32.totalorder %s39, %s55
      %p57 = scmp.eq.s32.totalorder %s17, 0
      %p58 = por %p56, %p57
      %s60 = sadd.s32 %s59, 1
      %p63 = scmp.eq.s32.totalorder %s11, 1
      %p64 = scmp.ne.s32.totalorder %s59, %s61
      %p65 = scmp.eq.s32.totalorder %s11, 0
      %p66 = por %p64, %p65
      %p67 = scmp.ne.s32.totalorder %s59, %s61
      %p68 = scmp.eq.s32.totalorder %s16, 1
      %p69 = por %p67, %p68
      %p70 = scmp.ne.s32.totalorder %s61, %s62
      %p71 = scmp.eq.s32.totalorder %s16, 0
      %p72 = por %p70, %p71
      %p73 = scmp.ne.s32.totalorder %s61, %s62
      %p74 = scmp.eq.s32.totalorder %s17, 1
      %p75 = por %p73, %p74
      %p77 = scmp.ne.s32.totalorder %s62, %s76
      %p78 = scmp.eq.s32.totalorder %s17, 0
      %p79 = por %p77, %p78
      %s81 = sadd.s32 %s80, 1
      %p84 = scmp.eq.s32.totalorder %s11, 1
      %p85 = scmp.ne.s32.totalorder %s80, %s82
      %p86 = scmp.eq.s32.totalorder %s11, 0
      %p87 = por %p85, %p86
      %p88 = scmp.ne.s32.totalorder %s80, %s82
      %p89 = scmp.eq.s32.totalorder %s16, 1
      %p90 = por %p88, %p89
      %p91 = scmp.ne.s32.totalorder %s82, %s83
      %p92 = scmp.eq.s32.totalorder %s16, 0
      %p93 = por %p91, %p92
      %p94 = scmp.ne.s32.totalorder %s82, %s83
      %p95 = scmp.eq.s32.totalorder %s17, 1
      %p96 = por %p94, %p95
      %p98 = scmp.ne.s32.totalorder %s83, %s97
      %p99 = scmp.eq.s32.totalorder %s17, 0
      %p100 = por %p98, %p99
      %s101 = ssub.s32 %s18, %s30
      %s102 = ssub.s32 %s19, %s26
      %s103 = sor.u32 %s101, %s102
      %p104 = scmp.eq.s32.totalorder %s103, 0
      %s106 = sadd.s32 %s105, 1
      %s107 = scalar_select %p104, %s105, %s106
      %p110 = pneg %p104
      %p111 = scmp.eq.s32.totalorder %s11, 1
      %p112 = por %p110, %p111
      %p113 = scmp.ne.s32.totalorder %s105, %s108
      %p114 = scmp.eq.s32.totalorder %s11, 0
      %p115 = por %p113, %p114
      %p116 = scmp.ne.s32.totalorder %s105, %s108
      %p117 = scmp.eq.s32.totalorder %s16, 1
      %p118 = por %p116, %p117
      %p119 = scmp.ne.s32.totalorder %s108, %s109
      %p120 = scmp.eq.s32.totalorder %s16, 0
      %p121 = por %p119, %p120
      %p122 = scmp.ne.s32.totalorder %s108, %s109
      %p123 = scmp.eq.s32.totalorder %s17, 1
      %p124 = por %p122, %p123
      %p126 = scmp.ne.s32.totalorder %s109, %s125
      %p127 = scmp.eq.s32.totalorder %s17, 0
      %p128 = por %p126, %p127
      %p129 = scmp.le.s32.totalorder 1, %s11
      %p130 = scmp.lt.s32.totalorder %s11, 3
      %p131 = pnand %p129, %p130
      %p132 = pneg %p131
      // Predicated region
      $region9: #{attention_module.1} parent=5 // pred_check
        _
      $region10: #{attention_module.1} parent=5 // pred_check_branch
        %134 = sbr.rel (%p131) target = $region12
      $region11: #{attention_module.1} parent=5 // pred_region
        %s135 = ssub.s32 %s11, 1
        // Predicated region
        $region13: #{attention_module.1} parent=11 // pred_check
          %p136 = pneg %p72
        $region14: #{attention_module.1} parent=11 // pred_check_branch
          %138 = sbr.rel (%p136) target = $region16
        $region15: #{attention_module.1} parent=11 // pred_region
          %s140 = ssub.s32 16, 16
          %141 = vsyncadd [#allocation3], %s140
          %s143 = sshll.u32 %s1, 4
          %s144 = int_to_ptr.vmem [resolvable:$true] %s143
          %146 = dma.vmem_to_smem %s144, 16, [#allocation2], [#allocation3]
        $region16: #{attention_module.1} parent=11 // pred_fallthru
          _
        // Predicated region
        $region17: #{attention_module.1} parent=11 // pred_check
          %p147 = pneg %p93
        $region18: #{attention_module.1} parent=11 // pred_check_branch
          %149 = sbr.rel (%p147) target = $region20
        $region19: #{attention_module.1} parent=11 // pred_region
          %s151 = ssub.s32 16, 16
          %152 = vsyncadd [#allocation5], %s151
          %s154 = sshll.u32 %s2, 4
          %s155 = int_to_ptr.vmem [resolvable:$true] %s154
          %157 = dma.vmem_to_smem %s155, 16, [#allocation4], [#allocation5]
        $region20: #{attention_module.1} parent=11 // pred_fallthru
          _
      $region12: #{attention_module.1} parent=5 // pred_fallthru
        _
      %p158 = scmp.lt.s32.totalorder %s11, 2
      // Predicated region
      $region21: #{attention_module.1} parent=5 // pred_check
        %p159 = pneg %p158
      $region22: #{attention_module.1} parent=5 // pred_check_branch
        %161 = sbr.rel (%p159) target = $region24
      $region23: #{attention_module.1} parent=5 // pred_region
        // Predicated region
        $region25: #{attention_module.1} parent=23 // pred_check
          %p162 = pneg %p45
        $region26: #{attention_module.1} parent=23 // pred_check_branch
          %164 = sbr.rel (%p162) target = $region28
        $region27: #{attention_module.1} parent=23 // pred_region
          %p165 = scmp.lt.s32.totalorder %s18, 1
          %s166 = scalar_select %p165, %s18, 1
          %p167 = scmp.lt.s32.totalorder %s19, 0
          %s168 = scalar_select %p167, %s19, 0
          %s169 = smul.addr %s166, 4
          %s170 = sadd.s32 %s168, %s169
          %s171 = smul.addr %s170, 2
          %s172 = scalar_lea.vmem %s0, %s171
        $region28: #{attention_module.1} parent=23 // pred_fallthru
          _
      $region24: #{attention_module.1} parent=5 // pred_fallthru
        _
      %p173 = scmp.le.s32.totalorder 1, %s11
      %p174 = scmp.lt.s32.totalorder %s11, 3
      %p175 = pnand %p173, %p174
      %p176 = pneg %p175
      // Predicated region
      $region29: #{attention_module.1} parent=5 // pred_check
        _
      $region30: #{attention_module.1} parent=5 // pred_check_branch
        %178 = sbr.rel (%p175) target = $region32
      $region31: #{attention_module.1} parent=5 // pred_region
        %s179 = ssub.s32 %s11, 1
        // Predicated region
        $region33: #{attention_module.1} parent=31 // pred_check
          %p180 = pneg %p72
        $region34: #{attention_module.1} parent=31 // pred_check_branch
          %182 = sbr.rel (%p180) target = $region36
        $region35: #{attention_module.1} parent=31 // pred_region
          %183 = dma.done [#allocation3], 16
        $region36: #{attention_module.1} parent=31 // pred_fallthru
          _
        // Predicated region
        $region37: #{attention_module.1} parent=31 // pred_check
          %p184 = pneg %p93
        $region38: #{attention_module.1} parent=31 // pred_check_branch
          %186 = sbr.rel (%p184) target = $region40
        $region39: #{attention_module.1} parent=31 // pred_region
          %187 = dma.done [#allocation5], 16
        $region40: #{attention_module.1} parent=31 // pred_fallthru
          _
        %188 = sfence
        %p189 = scmp.lt.s32.totalorder %s20, 1
        %s190 = scalar_select %p189, %s20, 1
        %p191 = scmp.lt.s32.totalorder %s21, 0
        %s192 = scalar_select %p191, %s21, 0
        %s193 = smul.addr %s190, 4
        %s194 = sadd.s32 %s192, %s193
        %s195 = smul.addr %s194, 2
        %s196 = scalar_lea.vmem %s0, %s195
        %p197 = pneg %p51
        %p198 = pneg %p48
        %p199 = pneg %p72
        %p200 = pneg %p69
        %p201 = pneg %p93
        %p202 = pneg %p90
        %p203 = pneg %p121
        %p204 = pneg %p118
        %p205 = scmp.lt.s32.totalorder %s20, 1
        %s206 = scalar_select %p205, %s20, 1
        %p207 = scmp.lt.s32.totalorder %s21, 0
        %s208 = scalar_select %p207, %s21, 0
        %s209 = smul.addr %s206, 4
        %s210 = sadd.s32 %s208, %s209
        %s211 = smul.addr %s210, 2
        %s212 = scalar_lea.vmem %s3, %s211
        %p213 = scmp.lt.s32.totalorder %s20, 1
        %s214 = scalar_select %p213, %s20, 1
        %p215 = scmp.lt.s32.totalorder %s21, 0
        %s216 = scalar_select %p215, %s21, 0
        %s217 = smul.addr %s214, 4
        %s218 = sadd.s32 %s216, %s217
        %s219 = smul.addr %s218, 2
        %s220 = scalar_lea.vmem %s0, %s219
        %p221 = scmp.lt.s32.totalorder %s20, 1
        %s222 = scalar_select %p221, %s20, 1
        %p223 = scmp.lt.s32.totalorder %s21, 0
        %s224 = scalar_select %p223, %s21, 0
        %s225 = smul.addr %s222, 4
        %s226 = sadd.s32 %s224, %s225
        %s227 = smul.addr %s226, 2
        %s228 = scalar_lea.vmem %s3, %s227
        %v229 = vld [vmem:[%s220] sm:$0x3]
        %v230 = vld [vmem:[%s220 + $0x2] sm:$0x3]
        %v231 = vld [vmem:[%s220 + $0x4] sm:$0x3]
        %v232 = vld [vmem:[%s220 + $0x6] sm:$0x3]
        %s233 = sld [smem:[#allocation2]]
        %v234 = vstv %s233
        %v235 = vmul.f32 %v234, %v229
        %s236 = sld [smem:[#allocation2 + $0x1]]
        %v237 = vstv %s236
        %v238 = vmul.f32 %v237, %v230
        %v239 = vadd.f32 %v235, %v238
        %s240 = sld [smem:[#allocation2 + $0x2]]
        %v241 = vstv %s240
        %v242 = vmul.f32 %v241, %v231
        %v243 = vadd.f32 %v239, %v242
        %s244 = sld [smem:[#allocation2 + $0x3]]
        %v245 = vstv %s244
        %v246 = vmul.f32 %v245, %v232
        %v247 = vadd.f32 %v243, %v246
        %s248 = sld [smem:[#allocation4]]
        %v249 = vstv %s248
        %v250 = vadd.f32 %v247, %v249
        %v251 = vsub.f32 0.0, %v250
        %v252 = vmul.f32 %v251, 1.442695
        %v253 = vpow.pop %v252
        %v254 = vadd.f32 %v253, 1.0
        %v255 = vrcp.pop %v254
        %v256 = vmul.f32 %v255, %v229
        %257 = vst [vmem:[%s228] sm:$0x3] %v256
        %s258 = sld [smem:[#allocation2 + $0x4]]
        %v259 = vstv %s258
        %v260 = vmul.f32 %v259, %v229
        %s261 = sld [smem:[#allocation2 + $0x5]]
        %v262 = vstv %s261
        %v263 = vmul.f32 %v262, %v230
        %v264 = vadd.f32 %v260, %v263
        %s265 = sld [smem:[#allocation2 + $0x6]]
        %v266 = vstv %s265
        %v267 = vmul.f32 %v266, %v231
        %v268 = vadd.f32 %v264, %v267
        %s269 = sld [smem:[#allocation2 + $0x7]]
        %v270 = vstv %s269
        %v271 = vmul.f32 %v270, %v232
        %v272 = vadd.f32 %v268, %v271
        %s273 = sld [smem:[#allocation4 + $0x1]]
        %v274 = vstv %s273
        %v275 = vadd.f32 %v272, %v274
        %v276 = vsub.f32 0.0, %v275
        %v277 = vmul.f32 %v276, 1.442695
        %v278 = vpow.pop %v277
        %v279 = vadd.f32 %v278, 1.0
        %v280 = vrcp.pop %v279
        %v281 = vmul.f32 %v280, %v230
        %s282 = scalar_lea.vmem %s228, 2
        %283 = vst [vmem:[%s282] sm:$0x3] %v281
        %s284 = sld [smem:[#allocation2 + $0x8]]
        %v285 = vstv %s284
        %v286 = vmul.f32 %v285, %v229
        %s287 = sld [smem:[#allocation2 + $0x9]]
        %v288 = vstv %s287
        %v289 = vmul.f32 %v288, %v230
        %v290 = vadd.f32 %v286, %v289
        %s291 = sld [smem:[#allocation2 + $0xa]]
        %v292 = vstv %s291
        %v293 = vmul.f32 %v292, %v231
        %v294 = vadd.f32 %v290, %v293
        %s295 = sld [smem:[#allocation2 + $0xb]]
        %v296 = vstv %s295
        %v297 = vmul.f32 %v296, %v232
        %v298 = vadd.f32 %v294, %v297
        %s299 = sld [smem:[#allocation4 + $0x2]]
        %v300 = vstv %s299
        %v301 = vadd.f32 %v298, %v300
        %v302 = vsub.f32 0.0, %v301
        %v303 = vmul.f32 %v302, 1.442695
        %v304 = vpow.pop %v303
        %v305 = vadd.f32 %v304, 1.0
        %v306 = vrcp.pop %v305
        %v307 = vmul.f32 %v306, %v231
        %s308 = scalar_lea.vmem %s228, 4
        %309 = vst [vmem:[%s308] sm:$0x3] %v307
        %s310 = sld [smem:[#allocation2 + $0xc]]
        %v311 = vstv %s310
        %v312 = vmul.f32 %v311, %v229
        %s313 = sld [smem:[#allocation2 + $0xd]]
        %v314 = vstv %s313
        %v315 = vmul.f32 %v314, %v230
        %v316 = vadd.f32 %v312, %v315
        %s317 = sld [smem:[#allocation2 + $0xe]]
        %v318 = vstv %s317
        %v319 = vmul.f32 %v318, %v231
        %v320 = vadd.f32 %v316, %v319
        %s321 = sld [smem:[#allocation2 + $0xf]]
        %v322 = vstv %s321
        %v323 = vmul.f32 %v322, %v232
        %v324 = vadd.f32 %v320, %v323
        %s325 = sld [smem:[#allocation4 + $0x3]]
        %v326 = vstv %s325
        %v327 = vadd.f32 %v324, %v326
        %v328 = vsub.f32 0.0, %v327
        %v329 = vmul.f32 %v328, 1.442695
        %v330 = vpow.pop %v329
        %v331 = vadd.f32 %v330, 1.0
        %v332 = vrcp.pop %v331
        %v333 = vmul.f32 %v332, %v232
        %s334 = scalar_lea.vmem %s228, 6
        %335 = vst [vmem:[%s334] sm:$0x3] %v333
        %p336 = scmp.lt.s32.totalorder %s20, 1
        %s337 = scalar_select %p336, %s20, 1
        %p338 = scmp.lt.s32.totalorder %s21, 0
        %s339 = scalar_select %p338, %s21, 0
        %s340 = smul.addr %s337, 4
        %s341 = sadd.s32 %s339, %s340
        %s342 = smul.addr %s341, 2
        %s343 = scalar_lea.vmem %s3, %s342
        // Predicated region
        $region41: #{attention_module.1} parent=31 // pred_check
          %p344 = pneg %p118
        $region42: #{attention_module.1} parent=31 // pred_check_branch
          %346 = sbr.rel (%p344) target = $region44
        $region43: #{attention_module.1} parent=31 // pred_region
          _
        $region44: #{attention_module.1} parent=31 // pred_fallthru
          _
      $region32: #{attention_module.1} parent=5 // pred_fallthru
        _
      %p347 = scmp.le.s32.totalorder 2, %s11
      // Predicated region
      $region45: #{attention_module.1} parent=5 // pred_check
        %p348 = pneg %p347
      $region46: #{attention_module.1} parent=5 // pred_check_branch
        %350 = sbr.rel (%p348) target = $region48
      $region47: #{attention_module.1} parent=5 // pred_region
        %s351 = ssub.s32 %s11, 2
        // Predicated region
        $region49: #{attention_module.1} parent=47 // pred_check
          %p352 = pneg %p124
        $region50: #{attention_module.1} parent=47 // pred_check_branch
          %354 = sbr.rel (%p352) target = $region52
        $region51: #{attention_module.1} parent=47 // pred_region
          %p355 = scmp.lt.s32.totalorder %s22, 1
          %s356 = scalar_select %p355, %s22, 1
          %p357 = scmp.lt.s32.totalorder %s23, 0
          %s358 = scalar_select %p357, %s23, 0
          %s359 = smul.addr %s356, 4
          %s360 = sadd.s32 %s358, %s359
          %s361 = smul.addr %s360, 2
          %s362 = scalar_lea.vmem %s3, %s361
        $region52: #{attention_module.1} parent=47 // pred_fallthru
          _
      $region48: #{attention_module.1} parent=5 // pred_fallthru
        _
    $region6: #{attention_module.1} parent=1 // loop_footer
      %s15 = sadd.s32 1, %s11
    $region7: #{attention_module.1} parent=1 // loop_footer_branch
      %10 = sbr.rel target = $region3
    $region8: #{attention_module.1} parent=1 // loop_exit
      _
    %363 = vsyncpa [#allocation3], 1
    %s364 = scalar_lea.sflag [#allocation3], 1
    %365 = vsyncpa %s364, 1
    %366 = vsyncpa [#allocation5], 1

</llo_original>
